<compile_context>
chip_gen: v6e
topology: v6e:2x2x1
jax: 0.10.0
libtpu: 0.0.40
codegen_flags: <defaults>
</compile_context>

<pallas_src>
import functools

import jax
import jax.numpy as jnp
from jax.experimental import pallas as pl
from jax.experimental.pallas import tpu as pltpu


def _dwsep_kernel(x_ref, dwt_ref, b0_ref, wcomb_ref, b1_ref, o_ref, *,
                  KH, KW, stride, dilation, Cin, TH, Lpad):
    """One (batch, output-row-tile) grid step.

    x_ref    : (Hp, Lpad)       zero-padded, channel-interleaved input image
                                (lane axis = Wp*Cin zero-extended to Lpad).
    dwt_ref  : (KH*KW, Lpad)    depthwise weights (BN0 scale folded), lane-tiled.
    b0_ref   : (1, Lpad)        folded BN0 bias (lane-tiled).
    wcomb_ref: (Lpad, Wo*Cout)  fused "stride/interleave select + 1x1 conv +
                                BN1 scale" matrix.
    b1_ref   : (1, Wo*Cout)     folded BN1 bias (lane-tiled).
    o_ref    : (TH, Wo*Cout)    lane-dense output row tile.
    """
    h = pl.program_id(1)
    row_base = h * (TH * stride)
    if (TH * stride) % 8 == 0:
        row_base = pl.multiple_of(row_base, 8)

    # Depthwise conv: one aligned, full-width row-slab load per kh; the kw
    # column shifts ride on the XLU (pltpu.roll) instead of unaligned vlds.
    acc = jnp.zeros((TH, Lpad), jnp.float32)
    for kh in range(KH):
        r0 = row_base + kh * dilation
        if stride == 1:
            slab = x_ref[pl.ds(r0, TH), :]
        else:
            slab = x_ref[pl.ds(r0, TH, stride), :]          # strided sublane load
        for kw in range(KW):
            off = kw * dilation * Cin
            tap = slab if off == 0 else pltpu.roll(slab, shift=Lpad - off, axis=1)
            acc = acc + tap * dwt_ref[kh * KW + kw, :]

    # BN0 bias (scale already folded into dwt) + ReLU6, full-width lane-dense.
    # Columns outside the valid output set carry harmless garbage; the fused
    # pointwise matrix has zero rows there, so they never reach the output.
    y = jnp.clip(acc + b0_ref[0, :], 0.0, 6.0)

    # Fused stride-select + 1x1 conv + BN1 scale: single MXU matmul straight
    # from the interleaved layout to the interleaved output (no reshapes).
    out = jnp.dot(y, wcomb_ref[...], preferred_element_type=jnp.float32)

    # BN1 bias + ReLU6, lane-dense store.
    o_ref[...] = jnp.clip(out + b1_ref[0, :], 0.0, 6.0).astype(o_ref.dtype)


def basic_dw_conv(x_nchw, params, *, kernel_size, stride=1, padding=0, dilation=1):
    """Pallas implementation of BasicdwConv.forward (eval-mode BN). NCHW in/out."""
    (dw_w, bn0_g, bn0_b, bn0_m, bn0_v,
     pw_w, bn1_g, bn1_b, bn1_m, bn1_v) = params
    eps = 1e-5

    N, Cin, H, W = x_nchw.shape
    Cout = pw_w.shape[0]
    KH = KW = kernel_size

    Ho = (H + 2 * padding - dilation * (KH - 1) - 1) // stride + 1
    Wo = (W + 2 * padding - dilation * (KW - 1) - 1) // stride + 1
    Hp, Wp = H + 2 * padding, W + 2 * padding
    lane_out = Wo * Cout
    Lpad = ((Wp * Cin + 127) // 128) * 128     # lane axis rounded up to full vregs

    # ---- fold BatchNorm running stats into conv weights / biases ------------
    dw_scale = bn0_g / jnp.sqrt(bn0_v + eps)
    dw_bias = bn0_b - bn0_m * dw_scale
    pw_scale = bn1_g / jnp.sqrt(bn1_v + eps)
    pw_bias = bn1_b - bn1_m * pw_scale

    reps = -(-Lpad // Cin)
    # Depthwise weights * BN0 scale, tiled to the interleaved lane layout.
    dw2 = (dw_w[:, 0, :, :] * dw_scale[:, None, None]).astype(jnp.float32)   # (Cin,KH,KW)
    pat = jnp.transpose(dw2, (1, 2, 0)).reshape(KH * KW, Cin)
    dwt = jnp.tile(pat, (1, reps))[:, :Lpad]                                  # (KH*KW,Lpad)
    b0_t = jnp.tile(dw_bias.astype(jnp.float32), reps)[:Lpad].reshape(1, Lpad)

    # Pointwise (1x1) weights * BN1 scale, expanded to a block-diagonal matrix
    # that simultaneously (a) picks the strided output columns out of the
    # full-width interleaved activations and (b) applies the 1x1 conv.
    pwm = (pw_w[:, :, 0, 0] * pw_scale[:, None]).astype(jnp.float32).T        # (Cin,Cout)
    bd = jnp.einsum('wv,cn->wcvn', jnp.eye(Wo, dtype=jnp.float32), pwm)
    bd = bd.reshape(Wo * Cin, Wo * Cout)
    rows = ((jnp.arange(Wo) * (stride * Cin))[:, None]
            + jnp.arange(Cin)[None, :]).reshape(-1)
    wcomb = jnp.zeros((Lpad, lane_out), jnp.float32).at[rows].set(bd)
    b1_t = jnp.tile(pw_bias.astype(jnp.float32), Wo).reshape(1, lane_out)

    # ---- input relayout + zero padding, once, in HBM (fused by XLA) ---------
    # NOTE: the NCHW <-> interleaved conversions exist only to match the
    # PyTorch module's I/O; inside a network keep (N, H, W*C) end-to-end.
    x2 = jnp.transpose(x_nchw, (0, 2, 3, 1)).reshape(N, H, W * Cin).astype(jnp.float32)
    x2 = jnp.pad(x2, ((0, 0), (padding, padding),
                      (padding * Cin, Lpad - W * Cin - padding * Cin)))

    # ---- row-tile size: largest multiple of 8 dividing Ho within a budget ---
    if Ho % 8 == 0:
        budget = 2 << 20                        # ~2 MiB per in/out block
        cands = [t for t in range(8, Ho + 1, 8)
                 if Ho % t == 0 and t * max(Lpad, lane_out) * 4 <= budget]
        TH = max(cands) if cands else 8
    else:
        TH = Ho
    nH = Ho // TH

    kernel = functools.partial(
        _dwsep_kernel, KH=KH, KW=KW, stride=stride, dilation=dilation,
        Cin=Cin, TH=TH, Lpad=Lpad)

    # VMEM budget: double-buffered in/out + param blocks + live accumulators,
    # clamped to 40 MiB (safe under v7x's 64 MiB/TC; plenty for v5e/v6e).
    est = 4 * (2 * (Hp * Lpad + TH * lane_out + KH * KW * Lpad + Lpad
                    + Lpad * lane_out + lane_out) + 4 * TH * Lpad)
    vmem_limit = int(min(max(2 * est, 8 << 20), 40 << 20))

    out2 = pl.pallas_call(
        kernel,
        out_shape=jax.ShapeDtypeStruct((N, Ho, lane_out), jnp.float32),
        grid_spec=pltpu.PrefetchScalarGridSpec(
            num_scalar_prefetch=0,
            grid=(N, nH),
            in_specs=[
                pl.BlockSpec((None, Hp, Lpad), lambda b, h: (b, 0, 0)),
                pl.BlockSpec((KH * KW, Lpad), lambda b, h: (0, 0)),
                pl.BlockSpec((1, Lpad), lambda b, h: (0, 0)),
                pl.BlockSpec((Lpad, lane_out), lambda b, h: (0, 0)),
                pl.BlockSpec((1, lane_out), lambda b, h: (0, 0)),
            ],
            out_specs=pl.BlockSpec((None, TH, lane_out), lambda b, h: (b, h, 0)),
        ),
        compiler_params=pltpu.CompilerParams(
            dimension_semantics=("parallel", "parallel"),
            vmem_limit_bytes=vmem_limit),
    )(x2, dwt, b0_t, wcomb, b1_t)

    # (N, Ho, Wo*Cout) -> NCHW to match the PyTorch module's output convention.
    return out2.reshape(N, Ho, Wo, Cout).transpose(0, 3, 1, 2)


def _reference(x_nchw, params, *, kernel_size, stride, padding, dilation):
    """Pure-JAX reference (lax conv) for correctness checks."""
    del kernel_size
    (dw_w, bn0_g, bn0_b, bn0_m, bn0_v,
     pw_w, bn1_g, bn1_b, bn1_m, bn1_v) = params
    eps = 1e-5
    Cin = x_nchw.shape[1]

    y = jax.lax.conv_general_dilated(
        x_nchw, dw_w, window_strides=(stride, stride),
        padding=[(padding, padding), (padding, padding)],
        rhs_dilation=(dilation, dilation),
        dimension_numbers=("NCHW", "OIHW", "NCHW"),
        feature_group_count=Cin)
    y = (y - bn0_m[None, :, None, None]) / jnp.sqrt(bn0_v + eps)[None, :, None, None]
    y = y * bn0_g[None, :, None, None] + bn0_b[None, :, None, None]
    y = jnp.clip(y, 0.0, 6.0)

    y = jax.lax.conv_general_dilated(
        y, pw_w, window_strides=(1, 1), padding=[(0, 0), (0, 0)],
        dimension_numbers=("NCHW", "OIHW", "NCHW"))
    y = (y - bn1_m[None, :, None, None]) / jnp.sqrt(bn1_v + eps)[None, :, None, None]
    y = y * bn1_g[None, :, None, None] + bn1_b[None, :, None, None]
    return jnp.clip(y, 0.0, 6.0)


if __name__ == "__main__":
    # Shapes consistent with BasicdwConv(in_planes=4, out_planes=8, kernel_size=3):
    # x is NCHW (2, 4, 16, 16).  Checked at stride=1 and stride=2 (MobileNetV1
    # uses both), padding=1, dilation=1.
    N, Cin, Cout, H, W = 2, 4, 8, 16, 16
    K, dilation = 3, 1

    key = jax.random.PRNGKey(0)
    ks = jax.random.split(key, 9)
    x = jax.random.normal(ks[0], (N, Cin, H, W), jnp.float32)

    dw_w = jax.random.normal(ks[1], (Cin, 1, K, K), jnp.float32) * 0.2   # groups=Cin
    pw_w = jax.random.normal(ks[2], (Cout, Cin, 1, 1), jnp.float32) * 0.2
    bn0_g = 1.0 + 0.1 * jax.random.normal(ks[3], (Cin,), jnp.float32)
    bn0_b = 0.1 * jax.random.normal(ks[4], (Cin,), jnp.float32)
    bn0_m = 0.1 * jax.random.normal(ks[5], (Cin,), jnp.float32)
    bn0_v = jnp.abs(jax.random.normal(ks[6], (Cin,), jnp.float32)) + 0.5
    bn1_g = 1.0 + 0.1 * jax.random.normal(ks[7], (Cout,), jnp.float32)
    bn1_b = 0.1 * jax.random.normal(ks[8], (Cout,), jnp.float32)
    bn1_m = jnp.zeros((Cout,), jnp.float32)
    bn1_v = jnp.ones((Cout,), jnp.float32)

    params = (dw_w, bn0_g, bn0_b, bn0_m, bn0_v, pw_w, bn1_g, bn1_b, bn1_m, bn1_v)

    for stride, padding in [(1, 1), (2, 1)]:
        fn = jax.jit(functools.partial(basic_dw_conv, kernel_size=K, stride=stride,
                                       padding=padding, dilation=dilation))
        out = jax.block_until_ready(fn(x, params))
        ref = _reference(x, params, kernel_size=K, stride=stride,
                         padding=padding, dilation=dilation)
        Ho = (H + 2 * padding - dilation * (K - 1) - 1) // stride + 1
        Wo = (W + 2 * padding - dilation * (K - 1) - 1) // stride + 1
        assert out.shape == (N, Cout, Ho, Wo), out.shape
        assert jnp.allclose(out, ref, atol=1e-3, rtol=1e-3), \
            f"mismatch vs JAX reference (stride={stride})"

    print("KERNEL_OK")
</pallas_src>

<mosaic_0001>
module attributes {stable_mosaic.version = 11 : i64} {
  func.func @_dwsep_kernel(%arg0: i32, %arg1: i32, %arg2: memref<1x18x128xf32, #tpu.memory_space<vmem>>, %arg3: memref<9x128xf32, #tpu.memory_space<vmem>>, %arg4: memref<1x128xf32, #tpu.memory_space<vmem>>, %arg5: memref<128x128xf32, #tpu.memory_space<vmem>>, %arg6: memref<1x128xf32, #tpu.memory_space<vmem>>, %arg7: memref<1x16x128xf32, #tpu.memory_space<vmem>>) attributes {dimension_semantics = [#tpu.dimension_semantics<parallel>, #tpu.dimension_semantics<parallel>], iteration_bounds = array<i64: 2, 1>, scalar_prefetch = 0 : i64, scratch_operands = 0 : i64, tpu.core_type = #tpu.core_type<tc>, window_params = [{transform_indices = @transform_0, window_bounds = array<i64: 1, 18, 128>}, {pipeline_mode = #tpu.pipeline_mode<synchronous>, transform_indices = @transform_1, window_bounds = array<i64: 9, 128>}, {pipeline_mode = #tpu.pipeline_mode<synchronous>, transform_indices = @transform_2, window_bounds = array<i64: 1, 128>}, {pipeline_mode = #tpu.pipeline_mode<synchronous>, transform_indices = @transform_3, window_bounds = array<i64: 128, 128>}, {pipeline_mode = #tpu.pipeline_mode<synchronous>, transform_indices = @transform_4, window_bounds = array<i64: 1, 128>}, {transform_indices = @transform_5, window_bounds = array<i64: 1, 16, 128>}]} {
    %c16_i32 = arith.constant 16 : i32
    %0 = arith.muli %arg1, %c16_i32 : i32
    %1 = tpu.assume_multiple %0, 8 : i32
    %cst = arith.constant 0.000000e+00 : f32
    %2 = vector.broadcast %cst : f32 to vector<16x128xf32>
    %c0_i32 = arith.constant 0 : i32
    %3 = arith.addi %1, %c0_i32 : i32
    %c0 = arith.constant 0 : index
    %4 = arith.index_cast %3 : i32 to index
    %c0_0 = arith.constant 0 : index
    %5 = vector.load %arg2[%c0, %4, %c0_0] : memref<1x18x128xf32, #tpu.memory_space<vmem>>, vector<1x16x128xf32>
    %6 = vector.shape_cast %5 : vector<1x16x128xf32> to vector<16x128xf32>
    %c0_1 = arith.constant 0 : index
    %c0_2 = arith.constant 0 : index
    %7 = vector.load %arg3[%c0_1, %c0_2] : memref<9x128xf32, #tpu.memory_space<vmem>>, vector<1x128xf32>
    %8 = vector.shape_cast %7 : vector<1x128xf32> to vector<128xf32>
    %9 = vector.shape_cast %8 : vector<128xf32> to vector<1x128xf32>
    %10 = vector.broadcast %9 : vector<1x128xf32> to vector<16x128xf32>
    %11 = arith.mulf %6, %10 : vector<16x128xf32>
    %12 = arith.addf %2, %11 : vector<16x128xf32>
    %c124_i32 = arith.constant 124 : i32
    %13 = tpu.dynamic_rotate %6 by %c124_i32 dim 1 : vector<16x128xf32>, i32 -> vector<16x128xf32>
    %c1 = arith.constant 1 : index
    %c0_3 = arith.constant 0 : index
    %14 = vector.load %arg3[%c1, %c0_3] : memref<9x128xf32, #tpu.memory_space<vmem>>, vector<1x128xf32>
    %15 = vector.shape_cast %14 : vector<1x128xf32> to vector<128xf32>
    %16 = vector.shape_cast %15 : vector<128xf32> to vector<1x128xf32>
    %17 = vector.broadcast %16 : vector<1x128xf32> to vector<16x128xf32>
    %18 = arith.mulf %13, %17 : vector<16x128xf32>
    %19 = arith.addf %12, %18 : vector<16x128xf32>
    %c120_i32 = arith.constant 120 : i32
    %20 = tpu.dynamic_rotate %6 by %c120_i32 dim 1 : vector<16x128xf32>, i32 -> vector<16x128xf32>
    %c2 = arith.constant 2 : index
    %c0_4 = arith.constant 0 : index
    %21 = vector.load %arg3[%c2, %c0_4] : memref<9x128xf32, #tpu.memory_space<vmem>>, vector<1x128xf32>
    %22 = vector.shape_cast %21 : vector<1x128xf32> to vector<128xf32>
    %23 = vector.shape_cast %22 : vector<128xf32> to vector<1x128xf32>
    %24 = vector.broadcast %23 : vector<1x128xf32> to vector<16x128xf32>
    %25 = arith.mulf %20, %24 : vector<16x128xf32>
    %26 = arith.addf %19, %25 : vector<16x128xf32>
    %c1_i32 = arith.constant 1 : i32
    %27 = arith.addi %1, %c1_i32 : i32
    %c0_5 = arith.constant 0 : index
    %28 = arith.index_cast %27 : i32 to index
    %c0_6 = arith.constant 0 : index
    %29 = vector.load %arg2[%c0_5, %28, %c0_6] : memref<1x18x128xf32, #tpu.memory_space<vmem>>, vector<1x16x128xf32>
    %30 = vector.shape_cast %29 : vector<1x16x128xf32> to vector<16x128xf32>
    %c3 = arith.constant 3 : index
    %c0_7 = arith.constant 0 : index
    %31 = vector.load %arg3[%c3, %c0_7] : memref<9x128xf32, #tpu.memory_space<vmem>>, vector<1x128xf32>
    %32 = vector.shape_cast %31 : vector<1x128xf32> to vector<128xf32>
    %33 = vector.shape_cast %32 : vector<128xf32> to vector<1x128xf32>
    %34 = vector.broadcast %33 : vector<1x128xf32> to vector<16x128xf32>
    %35 = arith.mulf %30, %34 : vector<16x128xf32>
    %36 = arith.addf %26, %35 : vector<16x128xf32>
    %c124_i32_8 = arith.constant 124 : i32
    %37 = tpu.dynamic_rotate %30 by %c124_i32_8 dim 1 : vector<16x128xf32>, i32 -> vector<16x128xf32>
    %c4 = arith.constant 4 : index
    %c0_9 = arith.constant 0 : index
    %38 = vector.load %arg3[%c4, %c0_9] : memref<9x128xf32, #tpu.memory_space<vmem>>, vector<1x128xf32>
    %39 = vector.shape_cast %38 : vector<1x128xf32> to vector<128xf32>
    %40 = vector.shape_cast %39 : vector<128xf32> to vector<1x128xf32>
    %41 = vector.broadcast %40 : vector<1x128xf32> to vector<16x128xf32>
    %42 = arith.mulf %37, %41 : vector<16x128xf32>
    %43 = arith.addf %36, %42 : vector<16x128xf32>
    %c120_i32_10 = arith.constant 120 : i32
    %44 = tpu.dynamic_rotate %30 by %c120_i32_10 dim 1 : vector<16x128xf32>, i32 -> vector<16x128xf32>
    %c5 = arith.constant 5 : index
    %c0_11 = arith.constant 0 : index
    %45 = vector.load %arg3[%c5, %c0_11] : memref<9x128xf32, #tpu.memory_space<vmem>>, vector<1x128xf32>
    %46 = vector.shape_cast %45 : vector<1x128xf32> to vector<128xf32>
    %47 = vector.shape_cast %46 : vector<128xf32> to vector<1x128xf32>
    %48 = vector.broadcast %47 : vector<1x128xf32> to vector<16x128xf32>
    %49 = arith.mulf %44, %48 : vector<16x128xf32>
    %50 = arith.addf %43, %49 : vector<16x128xf32>
    %c2_i32 = arith.constant 2 : i32
    %51 = arith.addi %1, %c2_i32 : i32
    %c0_12 = arith.constant 0 : index
    %52 = arith.index_cast %51 : i32 to index
    %c0_13 = arith.constant 0 : index
    %53 = vector.load %arg2[%c0_12, %52, %c0_13] : memref<1x18x128xf32, #tpu.memory_space<vmem>>, vector<1x16x128xf32>
    %54 = vector.shape_cast %53 : vector<1x16x128xf32> to vector<16x128xf32>
    %c6 = arith.constant 6 : index
    %c0_14 = arith.constant 0 : index
    %55 = vector.load %arg3[%c6, %c0_14] : memref<9x128xf32, #tpu.memory_space<vmem>>, vector<1x128xf32>
    %56 = vector.shape_cast %55 : vector<1x128xf32> to vector<128xf32>
    %57 = vector.shape_cast %56 : vector<128xf32> to vector<1x128xf32>
    %58 = vector.broadcast %57 : vector<1x128xf32> to vector<16x128xf32>
    %59 = arith.mulf %54, %58 : vector<16x128xf32>
    %60 = arith.addf %50, %59 : vector<16x128xf32>
    %c124_i32_15 = arith.constant 124 : i32
    %61 = tpu.dynamic_rotate %54 by %c124_i32_15 dim 1 : vector<16x128xf32>, i32 -> vector<16x128xf32>
    %c7 = arith.constant 7 : index
    %c0_16 = arith.constant 0 : index
    %62 = vector.load %arg3[%c7, %c0_16] : memref<9x128xf32, #tpu.memory_space<vmem>>, vector<1x128xf32>
    %63 = vector.shape_cast %62 : vector<1x128xf32> to vector<128xf32>
    %64 = vector.shape_cast %63 : vector<128xf32> to vector<1x128xf32>
    %65 = vector.broadcast %64 : vector<1x128xf32> to vector<16x128xf32>
    %66 = arith.mulf %61, %65 : vector<16x128xf32>
    %67 = arith.addf %60, %66 : vector<16x128xf32>
    %c120_i32_17 = arith.constant 120 : i32
    %68 = tpu.dynamic_rotate %54 by %c120_i32_17 dim 1 : vector<16x128xf32>, i32 -> vector<16x128xf32>
    %c8 = arith.constant 8 : index
    %c0_18 = arith.constant 0 : index
    %69 = vector.load %arg3[%c8, %c0_18] : memref<9x128xf32, #tpu.memory_space<vmem>>, vector<1x128xf32>
    %70 = vector.shape_cast %69 : vector<1x128xf32> to vector<128xf32>
    %71 = vector.shape_cast %70 : vector<128xf32> to vector<1x128xf32>
    %72 = vector.broadcast %71 : vector<1x128xf32> to vector<16x128xf32>
    %73 = arith.mulf %68, %72 : vector<16x128xf32>
    %74 = arith.addf %67, %73 : vector<16x128xf32>
    %c0_19 = arith.constant 0 : index
    %c0_20 = arith.constant 0 : index
    %75 = vector.load %arg4[%c0_19, %c0_20] : memref<1x128xf32, #tpu.memory_space<vmem>>, vector<1x128xf32>
    %76 = vector.shape_cast %75 : vector<1x128xf32> to vector<128xf32>
    %77 = vector.shape_cast %76 : vector<128xf32> to vector<1x128xf32>
    %78 = vector.broadcast %77 : vector<1x128xf32> to vector<16x128xf32>
    %79 = arith.addf %74, %78 : vector<16x128xf32>
    %cst_21 = arith.constant 0.000000e+00 : f32
    %cst_22 = arith.constant 6.000000e+00 : f32
    %80 = vector.broadcast %cst_21 : f32 to vector<16x128xf32>
    %81 = arith.maximumf %80, %79 : vector<16x128xf32>
    %82 = vector.broadcast %cst_22 : f32 to vector<16x128xf32>
    %83 = arith.minimumf %82, %81 : vector<16x128xf32>
    %c0_23 = arith.constant 0 : index
    %c0_24 = arith.constant 0 : index
    %84 = vector.load %arg5[%c0_23, %c0_24] : memref<128x128xf32, #tpu.memory_space<vmem>>, vector<128x128xf32>
    %cst_25 = arith.constant dense<0.000000e+00> : vector<16x128xf32>
    %85 = tpu.matmul %83, %84, %cst_25 {dimension_numbers = #tpu.dot_dimension_numbers<[1], [0], [0], [1], [0, 0, 1, 1], [], []>} : vector<16x128xf32>, vector<128x128xf32>, vector<16x128xf32> -> vector<16x128xf32>
    %c0_26 = arith.constant 0 : index
    %c0_27 = arith.constant 0 : index
    %86 = vector.load %arg6[%c0_26, %c0_27] : memref<1x128xf32, #tpu.memory_space<vmem>>, vector<1x128xf32>
    %87 = vector.shape_cast %86 : vector<1x128xf32> to vector<128xf32>
    %88 = vector.shape_cast %87 : vector<128xf32> to vector<1x128xf32>
    %89 = vector.broadcast %88 : vector<1x128xf32> to vector<16x128xf32>
    %90 = arith.addf %85, %89 : vector<16x128xf32>
    %cst_28 = arith.constant 0.000000e+00 : f32
    %cst_29 = arith.constant 6.000000e+00 : f32
    %91 = vector.broadcast %cst_28 : f32 to vector<16x128xf32>
    %92 = arith.maximumf %91, %90 : vector<16x128xf32>
    %93 = vector.broadcast %cst_29 : f32 to vector<16x128xf32>
    %94 = arith.minimumf %93, %92 : vector<16x128xf32>
    %c0_30 = arith.constant 0 : index
    %c0_31 = arith.constant 0 : index
    %c0_32 = arith.constant 0 : index
    %95 = vector.load %arg7[%c0_30, %c0_31, %c0_32] : memref<1x16x128xf32, #tpu.memory_space<vmem>>, vector<1x16x128xf32>
    %96 = vector.shape_cast %95 : vector<1x16x128xf32> to vector<16x128xf32>
    %97 = vector.shape_cast %94 : vector<16x128xf32> to vector<1x16x128xf32>
    tpu.vector_store %arg7[%c0_30, %c0_31, %c0_32], %97 {strides = array<i32>} : memref<1x16x128xf32, #tpu.memory_space<vmem>>, vector<1x16x128xf32>,
    return
  }
  func.func @transform_0(%arg0: i32, %arg1: i32) -> (i32, i32, i32) {
    %c0_i32 = arith.constant 0 : i32
    %c0_i32_0 = arith.constant 0 : i32
    %c0_i32_1 = arith.constant 0 : i32
    return %arg0, %c0_i32, %c0_i32_0 : i32, i32, i32
  }
  func.func @transform_1(%arg0: i32, %arg1: i32) -> (i32, i32) {
    %c0_i32 = arith.constant 0 : i32
    %c0_i32_0 = arith.constant 0 : i32
    %c0_i32_1 = arith.constant 0 : i32
    return %c0_i32, %c0_i32_0 : i32, i32
  }
  func.func @transform_2(%arg0: i32, %arg1: i32) -> (i32, i32) {
    %c0_i32 = arith.constant 0 : i32
    %c0_i32_0 = arith.constant 0 : i32
    %c0_i32_1 = arith.constant 0 : i32
    return %c0_i32, %c0_i32_0 : i32, i32
  }
  func.func @transform_3(%arg0: i32, %arg1: i32) -> (i32, i32) {
    %c0_i32 = arith.constant 0 : i32
    %c0_i32_0 = arith.constant 0 : i32
    %c0_i32_1 = arith.constant 0 : i32
    return %c0_i32, %c0_i32_0 : i32, i32
  }
  func.func @transform_4(%arg0: i32, %arg1: i32) -> (i32, i32) {
    %c0_i32 = arith.constant 0 : i32
    %c0_i32_0 = arith.constant 0 : i32
    %c0_i32_1 = arith.constant 0 : i32
    return %c0_i32, %c0_i32_0 : i32, i32
  }
  func.func @transform_5(%arg0: i32, %arg1: i32) -> (i32, i32, i32) {
    %c0_i32 = arith.constant 0 : i32
    %c0_i32_0 = arith.constant 0 : i32
    return %arg0, %arg1, %c0_i32 : i32, i32, i32
  }
}

</mosaic_0001>

<llo_original>
// kernel: tile.21
$region0: #{tile.21}
  #allocation0 [shape = 's32[1]{0}', space=sflag, size = 0x4, scoped, tag = 'scoped memory for tile.21']
  %s0 = inlined_call_operand.vmem [shape: f32[4], index: 0, kind: input, shape index: {}]
  %s1 = inlined_call_operand.vmem [shape: f32[32,4], index: 1, kind: output, shape index: {}]
  // Predicated region
  $region2: #{tile.21} parent=0 // pred_check
    _
  $region3: #{tile.21} parent=0 // pred_check_branch
    %3 = sbr.rel (0) target = $region5
  $region4: #{tile.21} parent=0 // pred_region
    _
  $region5: #{tile.21} parent=0 // pred_fallthru
    _
  %v4 = vld [vmem:[%s0] ss:$0 sm:$0xff]
  %5 = vst [vmem:[%s1] sm:$0xff] %v4
  %s6 = scalar_lea.vmem %s1, 8
  %7 = vst [vmem:[%s6] sm:$0xff] %v4
  %s8 = scalar_lea.vmem %s1, 16
  %9 = vst [vmem:[%s8] sm:$0xff] %v4
  %s10 = scalar_lea.vmem %s1, 24
  %11 = vst [vmem:[%s10] sm:$0xff] %v4

// kernel: tile.22
$region0: #{tile.22}
  %s0 = inlined_call_operand.vmem [shape: f32[32,4], index: 0, kind: input, shape index: {}]
  %s1 = inlined_call_operand.vmem [shape: f32[1,128], index: 1, kind: output, shape index: {}]
  $region1: #{tile.22} parent=0
    #allocation0 [shape = 'u8[4096]{0}', space=vmem, size = 0x1000, scoped, tag = 'scoped mem for output reshape']
    %v2 = vld [vmem:[%s0] sm:$0x1]
    %vm3 = vcmask 31744
    %4 = vst.msk [vmem:[#allocation0] sm:$0x1] %vm3, %v2
    %s5 = scalar_lea.vmem %s0, 31
    %v6 = vld [vmem:[%s5] sm:$0x1]
    %7 = vrot.lane.b32.xlu0 %v6, 124
    %v8 = vpop.permute.xlu0 %7
    %vm9 = vcmask 1048544
    %10 = vst.msk [vmem:[#allocation0] sm:$0x1] %vm9, %v8
    %s11 = scalar_lea.vmem %s0, 30
    %v12 = vld [vmem:[%s11] sm:$0x1]
    %13 = vrot.lane.b32.xlu0 %v12, 120
    %v14 = vpop.permute.xlu0 %13
    %vm15 = vcmask 1015744
    %16 = vst.msk [vmem:[#allocation0] sm:$0x1] %vm15, %v14
    %s17 = scalar_lea.vmem %s0, 29
    %v18 = vld [vmem:[%s17] sm:$0x1]
    %19 = vrot.lane.b32.xlu0 %v18, 116
    %v20 = vpop.permute.xlu0 %19
    %vm21 = vcmask 982944
    %22 = vst.msk [vmem:[#allocation0] sm:$0x1] %vm21, %v20
    %s23 = scalar_lea.vmem %s0, 28
    %v24 = vld [vmem:[%s23] sm:$0x1]
    %25 = vrot.lane.b32.xlu0 %v24, 112
    %v26 = vpop.permute.xlu0 %25
    %vm27 = vcmask 950144
    %28 = vst.msk [vmem:[#allocation0] sm:$0x1] %vm27, %v26
    %s29 = scalar_lea.vmem %s0, 27
    %v30 = vld [vmem:[%s29] sm:$0x1]
    %31 = vrot.lane.b32.xlu0 %v30, 108
    %v32 = vpop.permute.xlu0 %31
    %vm33 = vcmask 917344
    %34 = vst.msk [vmem:[#allocation0] sm:$0x1] %vm33, %v32
    %s35 = scalar_lea.vmem %s0, 26
    %v36 = vld [vmem:[%s35] sm:$0x1]
    %37 = vrot.lane.b32.xlu0 %v36, 104
    %v38 = vpop.permute.xlu0 %37
    %vm39 = vcmask 884544
    %40 = vst.msk [vmem:[#allocation0] sm:$0x1] %vm39, %v38
    %s41 = scalar_lea.vmem %s0, 25
    %v42 = vld [vmem:[%s41] sm:$0x1]
    %43 = vrot.lane.b32.xlu0 %v42, 100
    %v44 = vpop.permute.xlu0 %43
    %vm45 = vcmask 851744
    %46 = vst.msk [vmem:[#allocation0] sm:$0x1] %vm45, %v44
    %s47 = scalar_lea.vmem %s0, 24
    %v48 = vld [vmem:[%s47] sm:$0x1]
    %49 = vrot.lane.b32.xlu0 %v48, 96
    %v50 = vpop.permute.xlu0 %49
    %vm51 = vcmask 818944
    %52 = vst.msk [vmem:[#allocation0] sm:$0x1] %vm51, %v50
    %s53 = scalar_lea.vmem %s0, 23
    %v54 = vld [vmem:[%s53] sm:$0x1]
    %55 = vrot.lane.b32.xlu0 %v54, 92
    %v56 = vpop.permute.xlu0 %55
    %vm57 = vcmask 786144
    %58 = vst.msk [vmem:[#allocation0] sm:$0x1] %vm57, %v56
    %s59 = scalar_lea.vmem %s0, 22
    %v60 = vld [vmem:[%s59] sm:$0x1]
    %61 = vrot.lane.b32.xlu0 %v60, 88
    %v62 = vpop.permute.xlu0 %61
    %vm63 = vcmask 753344
    %64 = vst.msk [vmem:[#allocation0] sm:$0x1] %vm63, %v62
    %s65 = scalar_lea.vmem %s0, 21
    %v66 = vld [vmem:[%s65] sm:$0x1]
    %67 = vrot.lane.b32.xlu0 %v66, 84
    %v68 = vpop.permute.xlu0 %67
    %vm69 = vcmask 720544
    %70 = vst.msk [vmem:[#allocation0] sm:$0x1] %vm69, %v68
    %s71 = scalar_lea.vmem %s0, 20
    %v72 = vld [vmem:[%s71] sm:$0x1]
    %73 = vrot.lane.b32.xlu0 %v72, 80
    %v74 = vpop.permute.xlu0 %73
    %vm75 = vcmask 687744
    %76 = vst.msk [vmem:[#allocation0] sm:$0x1] %vm75, %v74
    %s77 = scalar_lea.vmem %s0, 19
    %v78 = vld [vmem:[%s77] sm:$0x1]
    %79 = vrot.lane.b32.xlu0 %v78, 76
    %v80 = vpop.permute.xlu0 %79
    %vm81 = vcmask 654944
    %82 = vst.msk [vmem:[#allocation0] sm:$0x1] %vm81, %v80
    %s83 = scalar_lea.vmem %s0, 18
    %v84 = vld [vmem:[%s83] sm:$0x1]
    %85 = vrot.lane.b32.xlu0 %v84, 72
    %v86 = vpop.permute.xlu0 %85
    %vm87 = vcmask 622144
    %88 = vst.msk [vmem:[#allocation0] sm:$0x1] %vm87, %v86
    %s89 = scalar_lea.vmem %s0, 17
    %v90 = vld [vmem:[%s89] sm:$0x1]
    %91 = vrot.lane.b32.xlu0 %v90, 68
    %v92 = vpop.permute.xlu0 %91
    %vm93 = vcmask 589344
    %94 = vst.msk [vmem:[#allocation0] sm:$0x1] %vm93, %v92
    %s95 = scalar_lea.vmem %s0, 16
    %v96 = vld [vmem:[%s95] sm:$0x1]
    %97 = vrot.lane.b32.xlu0 %v96, 64
    %v98 = vpop.permute.xlu0 %97
    %vm99 = vcmask 556544
    %100 = vst.msk [vmem:[#allocation0] sm:$0x1] %vm99, %v98
    %s101 = scalar_lea.vmem %s0, 15
    %v102 = vld [vmem:[%s101] sm:$0x1]
    %103 = vrot.lane.b32.xlu0 %v102, 60
    %v104 = vpop.permute.xlu0 %103
    %vm105 = vcmask 523744
    %106 = vst.msk [vmem:[#allocation0] sm:$0x1] %vm105, %v104
    %s107 = scalar_lea.vmem %s0, 14
    %v108 = vld [vmem:[%s107] sm:$0x1]
    %109 = vrot.lane.b32.xlu0 %v108, 56
    %v110 = vpop.permute.xlu0 %109
    %vm111 = vcmask 490944
    %112 = vst.msk [vmem:[#allocation0] sm:$0x1] %vm111, %v110
    %s113 = scalar_lea.vmem %s0, 13
    %v114 = vld [vmem:[%s113] sm:$0x1]
    %115 = vrot.lane.b32.xlu0 %v114, 52
    %v116 = vpop.permute.xlu0 %115
    %vm117 = vcmask 458144
    %118 = vst.msk [vmem:[#allocation0] sm:$0x1] %vm117, %v116
    %s119 = scalar_lea.vmem %s0, 12
    %v120 = vld [vmem:[%s119] sm:$0x1]
    %121 = vrot.lane.b32.xlu0 %v120, 48
    %v122 = vpop.permute.xlu0 %121
    %vm123 = vcmask 425344
    %124 = vst.msk [vmem:[#allocation0] sm:$0x1] %vm123, %v122
    %s125 = scalar_lea.vmem %s0, 11
    %v126 = vld [vmem:[%s125] sm:$0x1]
    %127 = vrot.lane.b32.xlu0 %v126, 44
    %v128 = vpop.permute.xlu0 %127
    %vm129 = vcmask 392544
    %130 = vst.msk [vmem:[#allocation0] sm:$0x1] %vm129, %v128
    %s131 = scalar_lea.vmem %s0, 10
    %v132 = vld [vmem:[%s131] sm:$0x1]
    %133 = vrot.lane.b32.xlu0 %v132, 40
    %v134 = vpop.permute.xlu0 %133
    %vm135 = vcmask 359744
    %136 = vst.msk [vmem:[#allocation0] sm:$0x1] %vm135, %v134
    %s137 = scalar_lea.vmem %s0, 9
    %v138 = vld [vmem:[%s137] sm:$0x1]
    %139 = vrot.lane.b32.xlu0 %v138, 36
    %v140 = vpop.permute.xlu0 %139
    %vm141 = vcmask 326944
    %142 = vst.msk [vmem:[#allocation0] sm:$0x1] %vm141, %v140
    %s143 = scalar_lea.vmem %s0, 8
    %v144 = vld [vmem:[%s143] sm:$0x1]
    %145 = vrot.lane.b32.xlu0 %v144, 32
    %v146 = vpop.permute.xlu0 %145
    %vm147 = vcmask 294144
    %148 = vst.msk [vmem:[#allocation0] sm:$0x1] %vm147, %v146
    %s149 = scalar_lea.vmem %s0, 7
    %v150 = vld [vmem:[%s149] sm:$0x1]
    %151 = vrot.lane.b32.xlu0 %v150, 28
    %v152 = vpop.permute.xlu0 %151
    %vm153 = vcmask 261344
    %154 = vst.msk [vmem:[#allocation0] sm:$0x1] %vm153, %v152
    %s155 = scalar_lea.vmem %s0, 6
    %v156 = vld [vmem:[%s155] sm:$0x1]
    %157 = vrot.lane.b32.xlu0 %v156, 24
    %v158 = vpop.permute.xlu0 %157
    %vm159 = vcmask 228544
    %160 = vst.msk [vmem:[#allocation0] sm:$0x1] %vm159, %v158
    %s161 = scalar_lea.vmem %s0, 5
    %v162 = vld [vmem:[%s161] sm:$0x1]
    %163 = vrot.lane.b32.xlu0 %v162, 20
    %v164 = vpop.permute.xlu0 %163
    %vm165 = vcmask 195744
    %166 = vst.msk [vmem:[#allocation0] sm:$0x1] %vm165, %v164
    %s167 = scalar_lea.vmem %s0, 4
    %v168 = vld [vmem:[%s167] sm:$0x1]
    %169 = vrot.lane.b32.xlu0 %v168, 16
    %v170 = vpop.permute.xlu0 %169
    %vm171 = vcmask 162944
    %172 = vst.msk [vmem:[#allocation0] sm:$0x1] %vm171, %v170
    %s173 = scalar_lea.vmem %s0, 3
    %v174 = vld [vmem:[%s173] sm:$0x1]
    %175 = vrot.lane.b32.xlu0 %v174, 12
    %v176 = vpop.permute.xlu0 %175
    %vm177 = vcmask 130144
    %178 = vst.msk [vmem:[#allocation0] sm:$0x1] %vm177, %v176
    %s179 = scalar_lea.vmem %s0, 2
    %v180 = vld [vmem:[%s179] sm:$0x1]
    %181 = vrot.lane.b32.xlu0 %v180, 8
    %v182 = vpop.permute.xlu0 %181
    %vm183 = vcmask 97344
    %184 = vst.msk [vmem:[#allocation0] sm:$0x1] %vm183, %v182
    %s185 = scalar_lea.vmem %s0, 1
    %v186 = vld [vmem:[%s185] sm:$0x1]
    %187 = vrot.lane.b32.xlu0 %v186, 4
    %v188 = vpop.permute.xlu0 %187
    %vm189 = vcmask 64544
    %190 = vst.msk [vmem:[#allocation0] sm:$0x1] %vm189, %v188
    %s192 = sshll.u32 1, 1
    %s193 = ssub.s32 %s192, 1
    %v195 = vld [vmem:[#allocation0] sm:%s193]
    %s196 = sshll.u32 1, 1
    %s197 = ssub.s32 %s196, 1
    %198 = vst [vmem:[%s1] sm:%s197] %v195

// kernel: tile.26
$region0: #{tile.26}
  #allocation0 [shape = 's32[1]{0}', space=sflag, size = 0x4, scoped, tag = 'scoped memory for tile.26']
  %s0 = inlined_call_operand.vmem [shape: f32[8], index: 0, kind: input, shape index: {}]
  %s1 = inlined_call_operand.vmem [shape: f32[16,8], index: 1, kind: output, shape index: {}]
  // Predicated region
  $region2: #{tile.26} parent=0 // pred_check
    _
  $region3: #{tile.26} parent=0 // pred_check_branch
    %3 = sbr.rel (0) target = $region5
  $region4: #{tile.26} parent=0 // pred_region
    _
  $region5: #{tile.26} parent=0 // pred_fallthru
    _
  %v4 = vld [vmem:[%s0] ss:$0 sm:$0xff]
  %5 = vst [vmem:[%s1] sm:$0xff] %v4
  %s6 = scalar_lea.vmem %s1, 8
  %7 = vst [vmem:[%s6] sm:$0xff] %v4

// kernel: tile.27
$region0: #{tile.27}
  %s0 = inlined_call_operand.vmem [shape: f32[16,8], index: 0, kind: input, shape index: {}]
  %s1 = inlined_call_operand.vmem [shape: f32[1,128], index: 1, kind: output, shape index: {}]
  $region1: #{tile.27} parent=0
    #allocation0 [shape = 'u8[4096]{0}', space=vmem, size = 0x1000, scoped, tag = 'scoped mem for output reshape']
    %v2 = vld [vmem:[%s0] sm:$0x1]
    %vm3 = vcmask 64512
    %4 = vst.msk [vmem:[#allocation0] sm:$0x1] %vm3, %v2
    %s5 = scalar_lea.vmem %s0, 15
    %v6 = vld [vmem:[%s5] sm:$0x1]
    %7 = vrot.lane.b32.xlu0 %v6, 120
    %v8 = vpop.permute.xlu0 %7
    %vm9 = vcmask 1048512
    %10 = vst.msk [vmem:[#allocation0] sm:$0x1] %vm9, %v8
    %s11 = scalar_lea.vmem %s0, 14
    %v12 = vld [vmem:[%s11] sm:$0x1]
    %13 = vrot.lane.b32.xlu0 %v12, 112
    %v14 = vpop.permute.xlu0 %13
    %vm15 = vcmask 982912
    %16 = vst.msk [vmem:[#allocation0] sm:$0x1] %vm15, %v14
    %s17 = scalar_lea.vmem %s0, 13
    %v18 = vld [vmem:[%s17] sm:$0x1]
    %19 = vrot.lane.b32.xlu0 %v18, 104
    %v20 = vpop.permute.xlu0 %19
    %vm21 = vcmask 917312
    %22 = vst.msk [vmem:[#allocation0] sm:$0x1] %vm21, %v20
    %s23 = scalar_lea.vmem %s0, 12
    %v24 = vld [vmem:[%s23] sm:$0x1]
    %25 = vrot.lane.b32.xlu0 %v24, 96
    %v26 = vpop.permute.xlu0 %25
    %vm27 = vcmask 851712
    %28 = vst.msk [vmem:[#allocation0] sm:$0x1] %vm27, %v26
    %s29 = scalar_lea.vmem %s0, 11
    %v30 = vld [vmem:[%s29] sm:$0x1]
    %31 = vrot.lane.b32.xlu0 %v30, 88
    %v32 = vpop.permute.xlu0 %31
    %vm33 = vcmask 786112
    %34 = vst.msk [vmem:[#allocation0] sm:$0x1] %vm33, %v32
    %s35 = scalar_lea.vmem %s0, 10
    %v36 = vld [vmem:[%s35] sm:$0x1]
    %37 = vrot.lane.b32.xlu0 %v36, 80
    %v38 = vpop.permute.xlu0 %37
    %vm39 = vcmask 720512
    %40 = vst.msk [vmem:[#allocation0] sm:$0x1] %vm39, %v38
    %s41 = scalar_lea.vmem %s0, 9
    %v42 = vld [vmem:[%s41] sm:$0x1]
    %43 = vrot.lane.b32.xlu0 %v42, 72
    %v44 = vpop.permute.xlu0 %43
    %vm45 = vcmask 654912
    %46 = vst.msk [vmem:[#allocation0] sm:$0x1] %vm45, %v44
    %s47 = scalar_lea.vmem %s0, 8
    %v48 = vld [vmem:[%s47] sm:$0x1]
    %49 = vrot.lane.b32.xlu0 %v48, 64
    %v50 = vpop.permute.xlu0 %49
    %vm51 = vcmask 589312
    %52 = vst.msk [vmem:[#allocation0] sm:$0x1] %vm51, %v50
    %s53 = scalar_lea.vmem %s0, 7
    %v54 = vld [vmem:[%s53] sm:$0x1]
    %55 = vrot.lane.b32.xlu0 %v54, 56
    %v56 = vpop.permute.xlu0 %55
    %vm57 = vcmask 523712
    %58 = vst.msk [vmem:[#allocation0] sm:$0x1] %vm57, %v56
    %s59 = scalar_lea.vmem %s0, 6
    %v60 = vld [vmem:[%s59] sm:$0x1]
    %61 = vrot.lane.b32.xlu0 %v60, 48
    %v62 = vpop.permute.xlu0 %61
    %vm63 = vcmask 458112
    %64 = vst.msk [vmem:[#allocation0] sm:$0x1] %vm63, %v62
    %s65 = scalar_lea.vmem %s0, 5
    %v66 = vld [vmem:[%s65] sm:$0x1]
    %67 = vrot.lane.b32.xlu0 %v66, 40
    %v68 = vpop.permute.xlu0 %67
    %vm69 = vcmask 392512
    %70 = vst.msk [vmem:[#allocation0] sm:$0x1] %vm69, %v68
    %s71 = scalar_lea.vmem %s0, 4
    %v72 = vld [vmem:[%s71] sm:$0x1]
    %73 = vrot.lane.b32.xlu0 %v72, 32
    %v74 = vpop.permute.xlu0 %73
    %vm75 = vcmask 326912
    %76 = vst.msk [vmem:[#allocation0] sm:$0x1] %vm75, %v74
    %s77 = scalar_lea.vmem %s0, 3
    %v78 = vld [vmem:[%s77] sm:$0x1]
    %79 = vrot.lane.b32.xlu0 %v78, 24
    %v80 = vpop.permute.xlu0 %79
    %vm81 = vcmask 261312
    %82 = vst.msk [vmem:[#allocation0] sm:$0x1] %vm81, %v80
    %s83 = scalar_lea.vmem %s0, 2
    %v84 = vld [vmem:[%s83] sm:$0x1]
    %85 = vrot.lane.b32.xlu0 %v84, 16
    %v86 = vpop.permute.xlu0 %85
    %vm87 = vcmask 195712
    %88 = vst.msk [vmem:[#allocation0] sm:$0x1] %vm87, %v86
    %s89 = scalar_lea.vmem %s0, 1
    %v90 = vld [vmem:[%s89] sm:$0x1]
    %91 = vrot.lane.b32.xlu0 %v90, 8
    %v92 = vpop.permute.xlu0 %91
    %vm93 = vcmask 130112
    %94 = vst.msk [vmem:[#allocation0] sm:$0x1] %vm93, %v92
    %s96 = sshll.u32 1, 1
    %s97 = ssub.s32 %s96, 1
    %v99 = vld [vmem:[#allocation0] sm:%s97]
    %s100 = sshll.u32 1, 1
    %s101 = ssub.s32 %s100, 1
    %102 = vst [vmem:[%s1] sm:%s101] %v99

// kernel: basic_dw_conv.1
$region0: #{basic_dw_conv.1}
  #allocation0 [shape = 'u32[]', space=smem, size = 0x4, offset = 0x4, fixed_abs, tag = 'smem constant byte address 0x4 - core index']
  #allocation1 [shape = 'u32[144,128]{1,0:T(1,128)}', space=vmem, size = 0x12000, scoped, tag = 'internal scratch']
  %s0 = inlined_call_operand.vmem [shape: f32[2,18,128], index: 0, kind: input, shape index: {}]
  %s1 = inlined_call_operand.vmem [shape: f32[9,128], index: 1, kind: input, shape index: {}]
  %s2 = inlined_call_operand.vmem [shape: f32[1,128], index: 2, kind: input, shape index: {}]
  %s3 = inlined_call_operand.vmem [shape: f32[128,128], index: 3, kind: input, shape index: {}]
  %s4 = inlined_call_operand.vmem [shape: f32[1,128], index: 4, kind: input, shape index: {}]
  %s5 = inlined_call_operand.vmem [shape: f32[2,16,128], index: 5, kind: output, shape index: {}]
  %s6 = sld [smem:[#allocation0]]
  $region53: #{basic_dw_conv.1} parent=0
    _
  %s8 = ssub.s32 1, %s6
  %s9 = scalar_select 0, %s8, %s6
  loop: start=0, step=1, limit=4
  $region2: #{basic_dw_conv.1} parent=0 // loop_pre_header
    _
  $region3: #{basic_dw_conv.1} parent=0 // loop_header
    %s11 = sphi 0, %s15
    %p12 = scmp.ge.s32.totalorder %s11, 4
    %s18 = sphi 0, %s30
    %s19 = sphi 0, %s26
    %s20 = sphi 0, %s18
    %s21 = sphi 0, %s19
    %s22 = sphi 0, %s20
    %s23 = sphi 0, %s21
    %s33 = sphi 0, %s35
    %s36 = sphi 0, %s33
    %s37 = sphi 0, %s36
    %s53 = sphi 0, %s37
    %s57 = sphi 0, %s57
    %s59 = sphi 0, %s57
    %s60 = sphi 0, %s59
    %s74 = sphi 0, %s60
    %s78 = sphi 0, %s78
    %s80 = sphi 0, %s78
    %s81 = sphi 0, %s80
    %s95 = sphi 0, %s81
    %s99 = sphi 0, %s99
    %s101 = sphi 0, %s99
    %s102 = sphi 0, %s101
    %s116 = sphi 0, %s102
    %s120 = sphi 0, %s120
    %s122 = sphi 0, %s120
    %s123 = sphi 0, %s122
    %s137 = sphi 0, %s123
    %s145 = sphi 0, %s147
    %s148 = sphi 0, %s145
    %s149 = sphi 0, %s148
    %s165 = sphi 0, %s149
  $region4: #{basic_dw_conv.1} parent=0 // loop_header_branch
    %14 = sbr.rel (%p12) target = $region8
  $region5: #{basic_dw_conv.1} parent=0 // loop_body
    %s16 = ssub.s32 %s11, 1
    %s17 = ssub.s32 %s11, 2
    %s24 = sadd.s32 1, %s19
    %p25 = scmp.ge.s32.totalorder %s24, 1
    %s26 = scalar_select %p25, 0, %s24
    %s27 = sadd.s32 1, %s18
    %s28 = scalar_select %p25, %s27, %s18
    %p29 = scmp.ge.s32.totalorder %s28, 2
    %s30 = scalar_select %p29, 0, %s28
    %s31 = ssub.s32 %s18, %s30
    %p32 = scmp.eq.s32.totalorder %s31, 0
    %s34 = sadd.s32 %s33, 1
    %s35 = scalar_select %p32, %s33, %s34
    %p38 = pneg %p32
    %p39 = scmp.eq.s32.totalorder %s11, 1
    %p40 = por %p38, %p39
    %p41 = scmp.ne.s32.totalorder %s33, %s36
    %p42 = scmp.eq.s32.totalorder %s11, 0
    %p43 = por %p41, %p42
    %p44 = scmp.ne.s32.totalorder %s33, %s36
    %p45 = scmp.eq.s32.totalorder %s16, 1
    %p46 = por %p44, %p45
    %p47 = scmp.ne.s32.totalorder %s36, %s37
    %p48 = scmp.eq.s32.totalorder %s16, 0
    %p49 = por %p47, %p48
    %p50 = scmp.ne.s32.totalorder %s36, %s37
    %p51 = scmp.eq.s32.totalorder %s17, 1
    %p52 = por %p50, %p51
    %p54 = scmp.ne.s32.totalorder %s37, %s53
    %p55 = scmp.eq.s32.totalorder %s17, 0
    %p56 = por %p54, %p55
    %s58 = sadd.s32 %s57, 1
    %p61 = scmp.eq.s32.totalorder %s11, 1
    %p62 = scmp.ne.s32.totalorder %s57, %s59
    %p63 = scmp.eq.s32.totalorder %s11, 0
    %p64 = por %p62, %p63
    %p65 = scmp.ne.s32.totalorder %s57, %s59
    %p66 = scmp.eq.s32.totalorder %s16, 1
    %p67 = por %p65, %p66
    %p68 = scmp.ne.s32.totalorder %s59, %s60
    %p69 = scmp.eq.s32.totalorder %s16, 0
    %p70 = por %p68, %p69
    %p71 = scmp.ne.s32.totalorder %s59, %s60
    %p72 = scmp.eq.s32.totalorder %s17, 1
    %p73 = por %p71, %p72
    %p75 = scmp.ne.s32.totalorder %s60, %s74
    %p76 = scmp.eq.s32.totalorder %s17, 0
    %p77 = por %p75, %p76
    %s79 = sadd.s32 %s78, 1
    %p82 = scmp.eq.s32.totalorder %s11, 1
    %p83 = scmp.ne.s32.totalorder %s78, %s80
    %p84 = scmp.eq.s32.totalorder %s11, 0
    %p85 = por %p83, %p84
    %p86 = scmp.ne.s32.totalorder %s78, %s80
    %p87 = scmp.eq.s32.totalorder %s16, 1
    %p88 = por %p86, %p87
    %p89 = scmp.ne.s32.totalorder %s80, %s81
    %p90 = scmp.eq.s32.totalorder %s16, 0
    %p91 = por %p89, %p90
    %p92 = scmp.ne.s32.totalorder %s80, %s81
    %p93 = scmp.eq.s32.totalorder %s17, 1
    %p94 = por %p92, %p93
    %p96 = scmp.ne.s32.totalorder %s81, %s95
    %p97 = scmp.eq.s32.totalorder %s17, 0
    %p98 = por %p96, %p97
    %s100 = sadd.s32 %s99, 1
    %p103 = scmp.eq.s32.totalorder %s11, 1
    %p104 = scmp.ne.s32.totalorder %s99, %s101
    %p105 = scmp.eq.s32.totalorder %s11, 0
    %p106 = por %p104, %p105
    %p107 = scmp.ne.s32.totalorder %s99, %s101
    %p108 = scmp.eq.s32.totalorder %s16, 1
    %p109 = por %p107, %p108
    %p110 = scmp.ne.s32.totalorder %s101, %s102
    %p111 = scmp.eq.s32.totalorder %s16, 0
    %p112 = por %p110, %p111
    %p113 = scmp.ne.s32.totalorder %s101, %s102
    %p114 = scmp.eq.s32.totalorder %s17, 1
    %p115 = por %p113, %p114
    %p117 = scmp.ne.s32.totalorder %s102, %s116
    %p118 = scmp.eq.s32.totalorder %s17, 0
    %p119 = por %p117, %p118
    %s121 = sadd.s32 %s120, 1
    %p124 = scmp.eq.s32.totalorder %s11, 1
    %p125 = scmp.ne.s32.totalorder %s120, %s122
    %p126 = scmp.eq.s32.totalorder %s11, 0
    %p127 = por %p125, %p126
    %p128 = scmp.ne.s32.totalorder %s120, %s122
    %p129 = scmp.eq.s32.totalorder %s16, 1
    %p130 = por %p128, %p129
    %p131 = scmp.ne.s32.totalorder %s122, %s123
    %p132 = scmp.eq.s32.totalorder %s16, 0
    %p133 = por %p131, %p132
    %p134 = scmp.ne.s32.totalorder %s122, %s123
    %p135 = scmp.eq.s32.totalorder %s17, 1
    %p136 = por %p134, %p135
    %p138 = scmp.ne.s32.totalorder %s123, %s137
    %p139 = scmp.eq.s32.totalorder %s17, 0
    %p140 = por %p138, %p139
    %s141 = ssub.s32 %s18, %s30
    %s142 = ssub.s32 %s19, %s26
    %s143 = sor.u32 %s141, %s142
    %p144 = scmp.eq.s32.totalorder %s143, 0
    %s146 = sadd.s32 %s145, 1
    %s147 = scalar_select %p144, %s145, %s146
    %p150 = pneg %p144
    %p151 = scmp.eq.s32.totalorder %s11, 1
    %p152 = por %p150, %p151
    %p153 = scmp.ne.s32.totalorder %s145, %s148
    %p154 = scmp.eq.s32.totalorder %s11, 0
    %p155 = por %p153, %p154
    %p156 = scmp.ne.s32.totalorder %s145, %s148
    %p157 = scmp.eq.s32.totalorder %s16, 1
    %p158 = por %p156, %p157
    %p159 = scmp.ne.s32.totalorder %s148, %s149
    %p160 = scmp.eq.s32.totalorder %s16, 0
    %p161 = por %p159, %p160
    %p162 = scmp.ne.s32.totalorder %s148, %s149
    %p163 = scmp.eq.s32.totalorder %s17, 1
    %p164 = por %p162, %p163
    %p166 = scmp.ne.s32.totalorder %s149, %s165
    %p167 = scmp.eq.s32.totalorder %s17, 0
    %p168 = por %p166, %p167
    %p169 = scmp.le.s32.totalorder 1, %s11
    %p170 = scmp.lt.s32.totalorder %s11, 3
    %p171 = pnand %p169, %p170
    %p172 = pneg %p171
    // Predicated region
    $region9: #{basic_dw_conv.1} parent=5 // pred_check
      _
    $region10: #{basic_dw_conv.1} parent=5 // pred_check_branch
      %174 = sbr.rel (%p171) target = $region12
    $region11: #{basic_dw_conv.1} parent=5 // pred_region
      %s175 = ssub.s32 %s11, 1
      // Predicated region
      $region13: #{basic_dw_conv.1} parent=11 // pred_check
        %p176 = pneg %p70
      $region14: #{basic_dw_conv.1} parent=11 // pred_check_branch
        %178 = sbr.rel (%p176) target = $region16
      $region15: #{basic_dw_conv.1} parent=11 // pred_region
        _
      $region16: #{basic_dw_conv.1} parent=11 // pred_fallthru
        _
      // Predicated region
      $region17: #{basic_dw_conv.1} parent=11 // pred_check
        %p179 = pneg %p91
      $region18: #{basic_dw_conv.1} parent=11 // pred_check_branch
        %181 = sbr.rel (%p179) target = $region20
      $region19: #{basic_dw_conv.1} parent=11 // pred_region
        _
      $region20: #{basic_dw_conv.1} parent=11 // pred_fallthru
        _
      // Predicated region
      $region21: #{basic_dw_conv.1} parent=11 // pred_check
        %p182 = pneg %p112
      $region22: #{basic_dw_conv.1} parent=11 // pred_check_branch
        %184 = sbr.rel (%p182) target = $region24
      $region23: #{basic_dw_conv.1} parent=11 // pred_region
        _
      $region24: #{basic_dw_conv.1} parent=11 // pred_fallthru
        _
      // Predicated region
      $region25: #{basic_dw_conv.1} parent=11 // pred_check
        %p185 = pneg %p133
      $region26: #{basic_dw_conv.1} parent=11 // pred_check_branch
        %187 = sbr.rel (%p185) target = $region28
      $region27: #{basic_dw_conv.1} parent=11 // pred_region
        _
      $region28: #{basic_dw_conv.1} parent=11 // pred_fallthru
        _
    $region12: #{basic_dw_conv.1} parent=5 // pred_fallthru
      _
    %p188 = scmp.lt.s32.totalorder %s11, 2
    // Predicated region
    $region29: #{basic_dw_conv.1} parent=5 // pred_check
      %p189 = pneg %p188
    $region30: #{basic_dw_conv.1} parent=5 // pred_check_branch
      %191 = sbr.rel (%p189) target = $region32
    $region31: #{basic_dw_conv.1} parent=5 // pred_region
      // Predicated region
      $region33: #{basic_dw_conv.1} parent=31 // pred_check
        %p192 = pneg %p43
      $region34: #{basic_dw_conv.1} parent=31 // pred_check_branch
        %194 = sbr.rel (%p192) target = $region36
      $region35: #{basic_dw_conv.1} parent=31 // pred_region
        %p195 = scmp.lt.s32.totalorder %s18, 1
        %s196 = scalar_select %p195, %s18, 1
        %s197 = smul.addr %s196, 3
        %s198 = smul.addr %s197, 8
        %s199 = scalar_lea.vmem %s0, %s198
      $region36: #{basic_dw_conv.1} parent=31 // pred_fallthru
        _
    $region32: #{basic_dw_conv.1} parent=5 // pred_fallthru
      _
    %p200 = scmp.le.s32.totalorder 1, %s11
    %p201 = scmp.lt.s32.totalorder %s11, 3
    %p202 = pnand %p200, %p201
    %p203 = pneg %p202
    // Predicated region
    $region37: #{basic_dw_conv.1} parent=5 // pred_check
      _
    $region38: #{basic_dw_conv.1} parent=5 // pred_check_branch
      %205 = sbr.rel (%p202) target = $region40
    $region39: #{basic_dw_conv.1} parent=5 // pred_region
      %s206 = ssub.s32 %s11, 1
      %p207 = scmp.lt.s32.totalorder %s20, 1
      %s208 = scalar_select %p207, %s20, 1
      %s209 = smul.addr %s208, 3
      %s210 = smul.addr %s209, 8
      %s211 = scalar_lea.vmem %s0, %s210
      %p212 = pneg %p49
      %p213 = pneg %p46
      %p214 = pneg %p70
      %p215 = pneg %p67
      %p216 = pneg %p91
      %p217 = pneg %p88
      %p218 = pneg %p112
      %p219 = pneg %p109
      %p220 = pneg %p133
      %p221 = pneg %p130
      %p222 = pneg %p161
      %p223 = pneg %p158
      %s224 = smul.u32 2, %s21
      %p225 = scmp.lt.s32.totalorder %s20, 1
      %s226 = scalar_select %p225, %s20, 1
      %p227 = scmp.lt.s32.totalorder %s224, 1
      %s228 = scalar_select %p227, %s224, 1
      %s229 = smul.addr %s226, 2
      %s230 = sadd.s32 %s228, %s229
      %s231 = smul.addr %s230, 8
      %s232 = scalar_lea.vmem %s5, %s231
      %p233 = scmp.lt.s32.totalorder %s20, 1
      %s234 = scalar_select %p233, %s20, 1
      %s235 = smul.addr %s234, 3
      %s236 = smul.addr %s235, 8
      %s237 = scalar_lea.vmem %s0, %s236
      %s238 = smul.u32 2, %s21
      %p239 = scmp.lt.s32.totalorder %s20, 1
      %s240 = scalar_select %p239, %s20, 1
      %p241 = scmp.lt.s32.totalorder %s238, 1
      %s242 = scalar_select %p241, %s238, 1
      %s243 = smul.addr %s240, 2
      %s244 = sadd.s32 %s242, %s243
      %s245 = smul.addr %s244, 8
      %s246 = scalar_lea.vmem %s5, %s245
      %s247 = smul.u32 2, %s21
      %s248 = smul.u32 %s21, 16
      %s249 = scalar_lea.vmem %s237, %s248
      %v250 = vld [vmem:[%s249] sm:$0xff]
      %v251 = vld [vmem:[%s249 + $0x8] sm:$0xff]
      %v252 = vld [vmem:[%s1] sm:$0x1]
      %v253 = vlaneseq
      %v254 = vshrl.u32 %v253, 7
      %v255 = vsub.s32 0, %v254
      %v256 = vrot.slane %v252, %v255
      %v257 = vmul.f32 %v250, %v256
      %v258 = vmul.f32 %v251, %v256
      %v259 = vadd.f32 %v257, 0.0
      %v260 = vadd.f32 %v258, 0.0
      %261 = vrot.lane.b32.xlu0 %v250, 124
      %v262 = vpop.permute.xlu0 %261
      %263 = vrot.lane.b32.xlu0 %v251, 124
      %v264 = vpop.permute.xlu0 %263
      %v265 = vld [vmem:[%s1 + $0x1] sm:$0x1]
      %v266 = vlaneseq
      %v267 = vshrl.u32 %v266, 7
      %v268 = vsub.s32 0, %v267
      %v269 = vrot.slane %v265, %v268
      %v270 = vmul.f32 %v262, %v269
      %v271 = vmul.f32 %v264, %v269
      %v272 = vadd.f32 %v259, %v270
      %v273 = vadd.f32 %v260, %v271
      %274 = vrot.lane.b32.xlu0 %v250, 120
      %v275 = vpop.permute.xlu0 %274
      %276 = vrot.lane.b32.xlu0 %v251, 120
      %v277 = vpop.permute.xlu0 %276
      %v278 = vld [vmem:[%s1 + $0x2] sm:$0x1]
      %v279 = vlaneseq
      %v280 = vshrl.u32 %v279, 7
      %v281 = vsub.s32 0, %v280
      %v282 = vrot.slane %v278, %v281
      %v283 = vmul.f32 %v275, %v282
      %v284 = vmul.f32 %v277, %v282
      %v285 = vadd.f32 %v272, %v283
      %v286 = vadd.f32 %v273, %v284
      %s287 = sadd.s32 %s248, 1
      %s288 = scalar_lea.vmem %s237, %s287
      %v289 = vld [vmem:[%s288] sm:$0xff]
      %v290 = vld [vmem:[%s288 + $0x8] sm:$0xff]
      %v291 = vld [vmem:[%s1 + $0x3] sm:$0x1]
      %v292 = vlaneseq
      %v293 = vshrl.u32 %v292, 7
      %v294 = vsub.s32 0, %v293
      %v295 = vrot.slane %v291, %v294
      %v296 = vmul.f32 %v289, %v295
      %v297 = vmul.f32 %v290, %v295
      %v298 = vadd.f32 %v285, %v296
      %v299 = vadd.f32 %v286, %v297
      %300 = vrot.lane.b32.xlu0 %v289, 124
      %v301 = vpop.permute.xlu0 %300
      %302 = vrot.lane.b32.xlu0 %v290, 124
      %v303 = vpop.permute.xlu0 %302
      %v304 = vld [vmem:[%s1 + $0x4] sm:$0x1]
      %v305 = vlaneseq
      %v306 = vshrl.u32 %v305, 7
      %v307 = vsub.s32 0, %v306
      %v308 = vrot.slane %v304, %v307
      %v309 = vmul.f32 %v301, %v308
      %v310 = vmul.f32 %v303, %v308
      %v311 = vadd.f32 %v298, %v309
      %v312 = vadd.f32 %v299, %v310
      %313 = vrot.lane.b32.xlu0 %v289, 120
      %v314 = vpop.permute.xlu0 %313
      %315 = vrot.lane.b32.xlu0 %v290, 120
      %v316 = vpop.permute.xlu0 %315
      %v317 = vld [vmem:[%s1 + $0x5] sm:$0x1]
      %v318 = vlaneseq
      %v319 = vshrl.u32 %v318, 7
      %v320 = vsub.s32 0, %v319
      %v321 = vrot.slane %v317, %v320
      %v322 = vmul.f32 %v314, %v321
      %v323 = vmul.f32 %v316, %v321
      %v324 = vadd.f32 %v311, %v322
      %v325 = vadd.f32 %v312, %v323
      %s326 = sadd.s32 %s248, 2
      %s327 = scalar_lea.vmem %s237, %s326
      %v328 = vld [vmem:[%s327] sm:$0xff]
      %v329 = vld [vmem:[%s327 + $0x8] sm:$0xff]
      %v330 = vld [vmem:[%s1 + $0x6] sm:$0x1]
      %v331 = vlaneseq
      %v332 = vshrl.u32 %v331, 7
      %v333 = vsub.s32 0, %v332
      %v334 = vrot.slane %v330, %v333
      %v335 = vmul.f32 %v328, %v334
      %v336 = vmul.f32 %v329, %v334
      %v337 = vadd.f32 %v324, %v335
      %v338 = vadd.f32 %v325, %v336
      %339 = vrot.lane.b32.xlu0 %v328, 124
      %v340 = vpop.permute.xlu0 %339
      %341 = vrot.lane.b32.xlu0 %v329, 124
      %v342 = vpop.permute.xlu0 %341
      %v343 = vld [vmem:[%s1 + $0x7] sm:$0x1]
      %v344 = vlaneseq
      %v345 = vshrl.u32 %v344, 7
      %v346 = vsub.s32 0, %v345
      %v347 = vrot.slane %v343, %v346
      %v348 = vmul.f32 %v340, %v347
      %v349 = vmul.f32 %v342, %v347
      %v350 = vadd.f32 %v337, %v348
      %v351 = vadd.f32 %v338, %v349
      %352 = vrot.lane.b32.xlu0 %v328, 120
      %v353 = vpop.permute.xlu0 %352
      %354 = vrot.lane.b32.xlu0 %v329, 120
      %v355 = vpop.permute.xlu0 %354
      %v356 = vld [vmem:[%s1 + $0x8] sm:$0x1]
      %v357 = vlaneseq
      %v358 = vshrl.u32 %v357, 7
      %v359 = vsub.s32 0, %v358
      %v360 = vrot.slane %v356, %v359
      %v361 = vmul.f32 %v353, %v360
      %v362 = vmul.f32 %v355, %v360
      %v363 = vadd.f32 %v350, %v361
      %v364 = vadd.f32 %v351, %v362
      %v365 = vld [vmem:[%s2] sm:$0x1]
      %v367 = vlaneseq
      %v368 = vshrl.u32 %v367, 7
      %v369 = vsub.s32 0, %v368
      %v370 = vrot.slane %v365, %v369
      %v372 = vadd.f32 %v363, %v370
      %v373 = vadd.f32 %v364, %v370
      %v374 = vmax.f32 %v372, 0.0
      %v375 = vmax.f32 %v373, 0.0
      %v376 = vmin.f32 %v374, 6.0
      %v377 = vmin.f32 %v375, 6.0
      %v378 = vld [vmem:[%s3] sm:$0xff]
      %v379 = vld [vmem:[%s3 + $0x8] sm:$0xff]
      %v380 = vld [vmem:[%s3 + $0x10] sm:$0xff]
      %v381 = vld [vmem:[%s3 + $0x18] sm:$0xff]
      %v382 = vld [vmem:[%s3 + $0x20] sm:$0xff]
      %v383 = vld [vmem:[%s3 + $0x28] sm:$0xff]
      %v384 = vld [vmem:[%s3 + $0x30] sm:$0xff]
      %v385 = vld [vmem:[%s3 + $0x38] sm:$0xff]
      %v386 = vld [vmem:[%s3 + $0x40] sm:$0xff]
      %v387 = vld [vmem:[%s3 + $0x48] sm:$0xff]
      %v388 = vld [vmem:[%s3 + $0x50] sm:$0xff]
      %v389 = vld [vmem:[%s3 + $0x58] sm:$0xff]
      %v390 = vld [vmem:[%s3 + $0x60] sm:$0xff]
      %v391 = vld [vmem:[%s3 + $0x68] sm:$0xff]
      %v392 = vld [vmem:[%s3 + $0x70] sm:$0xff]
      %v393 = vld [vmem:[%s3 + $0x78] sm:$0xff]
      %v394 = vld [vmem:[%s4] sm:$0x1]
      %v396 = vlaneseq
      %v397 = vshrl.u32 %v396, 7
      %v398 = vsub.s32 0, %v397
      %v399 = vrot.slane %v394, %v398
      %401 = vmatprep.subr.mxu0 0.0
      %402 = vmatpush1.msra.mxu0 %v393
      %403 = vmatprep.subr.mxu0 0.0
      %404 = vmatpush1.msra.mxu0 %v392
      %405 = vmatprep.subr.mxu0 0.0
      %406 = vmatpush1.msra.mxu0 %v391
      %407 = vmatprep.subr.mxu0 0.0
      %408 = vmatpush1.msra.mxu0 %v390
      %409 = vmatprep.subr.mxu0 0.0
      %410 = vmatpush1.msra.mxu0 %v389
      %411 = vmatprep.subr.mxu0 0.0
      %412 = vmatpush1.msra.mxu0 %v388
      %413 = vmatprep.subr.mxu0 0.0
      %414 = vmatpush1.msra.mxu0 %v387
      %415 = vmatprep.subr.mxu0 0.0
      %416 = vmatpush1.msra.mxu0 %v386
      %417 = vmatprep.subr.mxu0 0.0
      %418 = vmatpush1.msra.mxu0 %v385
      %419 = vmatprep.subr.mxu0 0.0
      %420 = vmatpush1.msra.mxu0 %v384
      %421 = vmatprep.subr.mxu0 0.0
      %422 = vmatpush1.msra.mxu0 %v383
      %423 = vmatprep.subr.mxu0 0.0
      %424 = vmatpush1.msra.mxu0 %v382
      %425 = vmatprep.subr.mxu0 0.0
      %426 = vmatpush1.msra.mxu0 %v381
      %427 = vmatprep.subr.mxu0 0.0
      %428 = vmatpush1.msra.mxu0 %v380
      %429 = vmatprep.subr.mxu0 0.0
      %430 = vmatpush1.msra.mxu0 %v379
      %431 = vmatprep.subr.mxu0 0.0
      %432 = vmatpush1.msra.mxu0 %v378
      %433 = vmatprep.subr.mxu0 0.0
      %434 = vmatpush2.msra.mxu0 0.0
      %435 = vmatprep.subr.mxu0 0.0
      %436 = vmatpush2.msra.mxu0 0.0
      %437 = vmatprep.subr.mxu0 0.0
      %438 = vmatpush2.msra.mxu0 0.0
      %439 = vmatprep.subr.mxu0 0.0
      %440 = vmatpush2.msra.mxu0 0.0
      %441 = vmatprep.subr.mxu0 0.0
      %442 = vmatpush2.msra.mxu0 0.0
      %443 = vmatprep.subr.mxu0 0.0
      %444 = vmatpush2.msra.mxu0 0.0
      %445 = vmatprep.subr.mxu0 0.0
      %446 = vmatpush2.msra.mxu0 0.0
      %447 = vmatprep.subr.mxu0 0.0
      %448 = vmatpush2.msra.mxu0 0.0
      %449 = vmatprep.subr.mxu0 0.0
      %450 = vmatpush2.msra.mxu0 0.0
      %451 = vmatprep.subr.mxu0 0.0
      %452 = vmatpush2.msra.mxu0 0.0
      %453 = vmatprep.subr.mxu0 0.0
      %454 = vmatpush2.msra.mxu0 0.0
      %455 = vmatprep.subr.mxu0 0.0
      %456 = vmatpush2.msra.mxu0 0.0
      %457 = vmatprep.subr.mxu0 0.0
      %458 = vmatpush2.msra.mxu0 0.0
      %459 = vmatprep.subr.mxu0 0.0
      %460 = vmatpush2.msra.mxu0 0.0
      %461 = vmatprep.subr.mxu0 0.0
      %462 = vmatpush2.msra.mxu0 0.0
      %463 = vmatprep.subr.mxu0 0.0
      %464 = vmatpush2.msra.mxu0 0.0
      %465 = vmatprep.mubr.f32.mxu0 0.0
      %466 = vmatmul.mubr.f32.gmra.mxu0 %v376
      %v467 = vpop.f32.mrf.mxu0
      %v468 = vadd.f32 %v399, %v467
      %v469 = vpop.f32.mrf.mxu0
      %470 = vmatprep.mubr.f32.mxu0 0.0
      %471 = vmatmul.mubr.f32.gmra.mxu0 %v377
      %v472 = vpop.f32.mrf.mxu0
      %v473 = vadd.f32 %v399, %v472
      %v474 = vpop.f32.mrf.mxu0
      %475 = vdwg.mxu0
      %v476 = vmax.f32 %v468, 0.0
      %v477 = vmax.f32 %v473, 0.0
      %v478 = vmin.f32 %v476, 6.0
      %v479 = vmin.f32 %v477, 6.0
      %480 = vst [vmem:[%s246] sm:$0xff] %v478
      %481 = vst [vmem:[%s246 + $0x8] sm:$0xff] %v479
      %s482 = smul.u32 2, %s21
      %p483 = scmp.lt.s32.totalorder %s20, 1
      %s484 = scalar_select %p483, %s20, 1
      %p485 = scmp.lt.s32.totalorder %s482, 1
      %s486 = scalar_select %p485, %s482, 1
      %s487 = smul.addr %s484, 2
      %s488 = sadd.s32 %s486, %s487
      %s489 = smul.addr %s488, 8
      %s490 = scalar_lea.vmem %s5, %s489
      // Predicated region
      $region41: #{basic_dw_conv.1} parent=39 // pred_check
        %p491 = pneg %p158
      $region42: #{basic_dw_conv.1} parent=39 // pred_check_branch
        %493 = sbr.rel (%p491) target = $region44
      $region43: #{basic_dw_conv.1} parent=39 // pred_region
        %s494 = smul.u32 2, %s21
      $region44: #{basic_dw_conv.1} parent=39 // pred_fallthru
        _
    $region40: #{basic_dw_conv.1} parent=5 // pred_fallthru
      _
    %p495 = scmp.le.s32.totalorder 2, %s11
    // Predicated region
    $region45: #{basic_dw_conv.1} parent=5 // pred_check
      %p496 = pneg %p495
    $region46: #{basic_dw_conv.1} parent=5 // pred_check_branch
      %498 = sbr.rel (%p496) target = $region48
    $region47: #{basic_dw_conv.1} parent=5 // pred_region
      %s499 = ssub.s32 %s11, 2
      // Predicated region
      $region49: #{basic_dw_conv.1} parent=47 // pred_check
        %p500 = pneg %p164
      $region50: #{basic_dw_conv.1} parent=47 // pred_check_branch
        %502 = sbr.rel (%p500) target = $region52
      $region51: #{basic_dw_conv.1} parent=47 // pred_region
        %s503 = smul.u32 2, %s23
        %p504 = scmp.lt.s32.totalorder %s22, 1
        %s505 = scalar_select %p504, %s22, 1
        %p506 = scmp.lt.s32.totalorder %s503, 1
        %s507 = scalar_select %p506, %s503, 1
        %s508 = smul.addr %s505, 2
        %s509 = sadd.s32 %s507, %s508
        %s510 = smul.addr %s509, 8
        %s511 = scalar_lea.vmem %s5, %s510
      $region52: #{basic_dw_conv.1} parent=47 // pred_fallthru
        _
    $region48: #{basic_dw_conv.1} parent=5 // pred_fallthru
      _
  $region6: #{basic_dw_conv.1} parent=0 // loop_footer
    %s15 = sadd.s32 1, %s11
  $region7: #{basic_dw_conv.1} parent=0 // loop_footer_branch
    %10 = sbr.rel target = $region3
  $region8: #{basic_dw_conv.1} parent=0 // loop_exit
    _

</llo_original>
